<compile_context>
chip_gen: v5e
topology: v5e:2x2
jax: 0.10.0
libtpu: 0.0.40
codegen_flags: <defaults>
</compile_context>

<pallas_src>
import functools

import jax
import jax.numpy as jnp
from jax import lax
from jax.experimental import pallas as pl
from jax.experimental.pallas import tpu as pltpu

_LANES = 128
_SUBLANES = 8
_CHUNK_ROWS = 32                      # rows per inner-loop step (4 vregs / temp)
_MAX_ROWS_PER_BLOCK = 8192            # (8192, 128) f32 = 4 MiB per stream per buffer
_VMEM_LIMIT_BYTES = 32 * 1024 * 1024  # fits v5e/v6e (128 MiB) and v7x (64 MiB) VMEM


def _round_up(a, b):
    return -(-a // b) * b


def _focal_dice_kernel(x_ref, t_ref, of_ref, os_ref, oi_ref, *,
                       alpha, gamma, gamma_is_two, binary_targets,
                       n, rows_per_block, blocks_inner, may_need_mask):
    s = pl.program_id(0)      # shard (parallel across TCs on v7x)
    i = pl.program_id(1)      # block within shard (arbitrary / reduction axis)

    @pl.when(i == 0)
    def _():
        zeros = jnp.zeros((_SUBLANES, _LANES), jnp.float32)
        of_ref[0] = zeros
        os_ref[0] = zeros
        oi_ref[0] = zeros

    blk_elems = rows_per_block * _LANES
    # Global element offset of this grid step, based on the UN-clamped block index
    # (so duplicated/phantom blocks from the shard split are fully masked away).
    blk_start = (s * blocks_inner + i) * blk_elems

    def accumulate(masked):
        trip = rows_per_block // _CHUNK_ROWS

        def chunk(c, carry):
            af, asum, aint = carry
            r0 = pl.multiple_of(c * _CHUNK_ROWS, _CHUNK_ROWS)
            x = x_ref[pl.ds(r0, _CHUNK_ROWS), :].astype(jnp.float32)
            t = t_ref[pl.ds(r0, _CHUNK_ROWS), :].astype(jnp.float32)
            if masked:
                row = lax.broadcasted_iota(jnp.int32, (_CHUNK_ROWS, _LANES), 0)
                lane = lax.broadcasted_iota(jnp.int32, (_CHUNK_ROWS, _LANES), 1)
                idx = blk_start + (r0 + row) * _LANES + lane
                valid = idx < n
                # Mask BEFORE any log/compare: x=0, t=0 contributes exactly 0 to
                # every accumulated sum (focal, x+t, x*t) on both BCE paths.
                x = jnp.where(valid, x, 0.0)
                t = jnp.where(valid, t, 0.0)

            is_one = t == 1.0
            pt = jnp.where(is_one, x, 1.0 - x)
            aw = jnp.where(is_one, alpha, 1.0 - alpha)
            if binary_targets:
                # Exact for t in {0,1}: one EUP log instead of two + combine.
                bce = -jnp.maximum(jnp.log(pt), -100.0)
            else:
                bce = -(t * jnp.maximum(jnp.log(x), -100.0)
                        + (1.0 - t) * jnp.maximum(jnp.log(1.0 - x), -100.0))
            omp = 1.0 - pt
            mod = omp * omp if gamma_is_two else jnp.power(omp, gamma)
            focal = aw * mod * bce

            def vsum(v):   # (CHUNK,128) -> (8,128) with plain VPU adds
                return jnp.sum(v.reshape(-1, _SUBLANES, _LANES), axis=0)

            return af + vsum(focal), asum + vsum(x + t), aint + vsum(x * t)

        zeros = jnp.zeros((_SUBLANES, _LANES), jnp.float32)
        unroll = 2 if (trip >= 2 and trip % 2 == 0) else 1
        af, asum, aint = lax.fori_loop(0, trip, chunk, (zeros, zeros, zeros),
                                       unroll=unroll)
        of_ref[0] += af
        os_ref[0] += asum
        oi_ref[0] += aint

    if may_need_mask:
        full = blk_start + blk_elems <= n

        @pl.when(full)
        def _():
            accumulate(masked=False)

        @pl.when(jnp.logical_not(full))
        def _():
            accumulate(masked=True)
    else:
        accumulate(masked=False)


def focal_dice_loss(inputs, targets, alpha=0.7, gamma=2.0, beta=0.3, eps=1e-6,
                    *, binary_targets=True,
                    max_rows_per_block=_MAX_ROWS_PER_BLOCK, num_shards=2):
    """Pallas implementation of FocalDiceLoss.forward (inputs are probabilities).

    Note: like the PyTorch module, the focal weighting uses exact `t == 1` compares,
    so targets are assumed to be binary. `binary_targets=True` additionally uses the
    single-log BCE identity (exact only for t in {0,1}); set it to False for soft
    labels to get the general two-log BCE.
    """
    x = inputs.reshape(-1)      # native dtype on the HBM side; upcast in-kernel
    t = targets.reshape(-1)
    n = int(x.shape[0])
    assert n > 0, "FocalDiceLoss requires a non-empty input"

    rows = -(-n // _LANES)
    if rows * _LANES != n:      # rare: pad only the sub-row remainder (< 128 elems)
        pad = rows * _LANES - n
        x = jnp.pad(x, (0, pad))
        t = jnp.pad(t, (0, pad))
    x2 = x.reshape(rows, _LANES)    # free reshape when contiguous
    t2 = t.reshape(rows, _LANES)

    rows_per_block = min(int(max_rows_per_block), _round_up(rows, _CHUNK_ROWS))
    rows_per_block = _round_up(rows_per_block, _CHUNK_ROWS)
    blocks_total = -(-rows // rows_per_block)
    shards = int(num_shards) if blocks_total >= 2 else 1
    blocks_inner = -(-blocks_total // shards)
    covered = shards * blocks_inner * rows_per_block * _LANES
    may_need_mask = covered != n

    kernel = functools.partial(
        _focal_dice_kernel,
        alpha=float(alpha), gamma=float(gamma),
        gamma_is_two=(float(gamma) == 2.0),
        binary_targets=bool(binary_targets),
        n=n, rows_per_block=int(rows_per_block),
        blocks_inner=int(blocks_inner),
        may_need_mask=bool(may_need_mask))

    def in_map(s, i):
        # Clamp so a phantom block (uneven shard split) never DMAs fully OOB;
        # its contribution is zeroed in-kernel via the un-clamped global index.
        return (jnp.minimum(s * blocks_inner + i, blocks_total - 1), 0)

    in_spec = pl.BlockSpec((rows_per_block, _LANES), in_map)
    out_spec = pl.BlockSpec((1, _SUBLANES, _LANES), lambda s, i: (s, 0, 0))
    part = jax.ShapeDtypeStruct((shards, _SUBLANES, _LANES), jnp.float32)

    focal_p, sum_p, int_p = pl.pallas_call(
        kernel,
        out_shape=(part, part, part),
        grid_spec=pltpu.PrefetchScalarGridSpec(
            num_scalar_prefetch=0,
            grid=(shards, blocks_inner),
            in_specs=[in_spec, in_spec],
            out_specs=(out_spec, out_spec, out_spec),
        ),
        compiler_params=pltpu.CompilerParams(
            dimension_semantics=("parallel", "arbitrary"),
            vmem_limit_bytes=_VMEM_LIMIT_BYTES),
    )(x2, t2)

    # Tiny host-side combine of the per-shard (8,128) partial-sum slabs.
    focal_mean = jnp.sum(focal_p) / float(n)
    denom = jnp.sum(sum_p)                      # sum(x) + sum(t)
    inter = jnp.sum(int_p)                      # sum(x * t)
    dice = 1.0 - (2.0 * inter + eps) / (denom + eps)
    return focal_mean * (1.0 - beta) + dice * beta


def _reference(inputs, targets, alpha=0.7, gamma=2.0, beta=0.3, eps=1e-6):
    x = inputs.reshape(-1).astype(jnp.float32)
    t = targets.reshape(-1).astype(jnp.float32)
    bce = -(t * jnp.maximum(jnp.log(x), -100.0)
            + (1.0 - t) * jnp.maximum(jnp.log(1.0 - x), -100.0))
    pt = jnp.where(t == 1.0, x, 1.0 - x)
    aw = jnp.where(t == 1.0, alpha, 1.0 - alpha)
    focal = jnp.mean(aw * jnp.power(1.0 - pt, gamma) * bce)
    inter = jnp.sum(x * t)
    dice = 1.0 - (2.0 * inter + eps) / (jnp.sum(x) + jnp.sum(t) + eps)
    return focal * (1.0 - beta) + dice * beta


if __name__ == "__main__":
    key = jax.random.PRNGKey(0)
    ks = jax.random.split(key, 8)

    # 1) Primary small case: (2, 16, 16) probabilities + binary targets (tail mask).
    inp1 = jax.nn.sigmoid(jax.random.normal(ks[0], (2, 16, 16), dtype=jnp.float32))
    tgt1 = (jax.random.uniform(ks[1], (2, 16, 16)) > 0.5).astype(jnp.float32)
    l1 = focal_dice_loss(inp1, tgt1)
    jax.block_until_ready(l1)
    assert jnp.allclose(l1, _reference(inp1, tgt1), rtol=1e-5, atol=1e-6), l1

    # 2) Multi-block, 2-shard grid with an exactly-divisible extent (no masking path).
    inp2 = jax.nn.sigmoid(jax.random.normal(ks[2], (4, 64, 128), dtype=jnp.float32))
    tgt2 = (jax.random.uniform(ks[3], (4, 64, 128)) > 0.5).astype(jnp.float32)
    l2 = focal_dice_loss(inp2, tgt2, max_rows_per_block=64)
    jax.block_until_ready(l2)
    assert jnp.allclose(l2, _reference(inp2, tgt2), rtol=1e-5, atol=1e-6), l2

    # 3) Uneven shard split (3 real blocks over 2 shards -> clamped phantom block).
    inp3 = jax.nn.sigmoid(jax.random.normal(ks[4], (4, 96, 128), dtype=jnp.float32))
    tgt3 = (jax.random.uniform(ks[5], (4, 96, 128)) > 0.5).astype(jnp.float32)
    l3 = focal_dice_loss(inp3, tgt3, max_rows_per_block=128)
    jax.block_until_ready(l3)
    assert jnp.allclose(l3, _reference(inp3, tgt3), rtol=1e-5, atol=1e-6), l3

    # 4) Ragged size (n not a multiple of 128): sub-row pad + in-kernel tail mask.
    inp4 = jax.nn.sigmoid(jax.random.normal(ks[6], (3, 5, 7), dtype=jnp.float32))
    tgt4 = (jax.random.uniform(ks[7], (3, 5, 7)) > 0.5).astype(jnp.float32)
    l4 = focal_dice_loss(inp4, tgt4)
    jax.block_until_ready(l4)
    assert jnp.allclose(l4, _reference(inp4, tgt4), rtol=1e-5, atol=1e-6), l4

    print("KERNEL_OK")
</pallas_src>

<mosaic_0001>
module attributes {stable_mosaic.version = 11 : i64} {
  func.func @_focal_dice_kernel(%arg0: i32, %arg1: i32, %arg2: memref<32x128xf32, #tpu.memory_space<vmem>>, %arg3: memref<32x128xf32, #tpu.memory_space<vmem>>, %arg4: memref<1x8x128xf32, #tpu.memory_space<vmem>>, %arg5: memref<1x8x128xf32, #tpu.memory_space<vmem>>, %arg6: memref<1x8x128xf32, #tpu.memory_space<vmem>>) attributes {dimension_semantics = [#tpu.dimension_semantics<parallel>, #tpu.dimension_semantics<arbitrary>], iteration_bounds = array<i64: 1, 1>, scalar_prefetch = 0 : i64, scratch_operands = 0 : i64, tpu.core_type = #tpu.core_type<tc>, window_params = [{transform_indices = @transform_0, window_bounds = array<i64: 32, 128>}, {transform_indices = @transform_1, window_bounds = array<i64: 32, 128>}, {transform_indices = @transform_2, window_bounds = array<i64: 1, 8, 128>}, {transform_indices = @transform_3, window_bounds = array<i64: 1, 8, 128>}, {transform_indices = @transform_4, window_bounds = array<i64: 1, 8, 128>}]} {
    %c0_i32 = arith.constant 0 : i32
    %0 = arith.cmpi eq, %arg1, %c0_i32 : i32
    %1 = arith.extui %0 : i1 to i32
    %c0_i32_0 = arith.constant 0 : i32
    %2 = arith.cmpi ne, %1, %c0_i32_0 : i32
    scf.if %2 {
      %cst = arith.constant 0.000000e+00 : f32
      %13 = vector.broadcast %cst : f32 to vector<8x128xf32>
      %c0 = arith.constant 0 : index
      %c0_4 = arith.constant 0 : index
      %c0_5 = arith.constant 0 : index
      %14 = vector.load %arg4[%c0, %c0_4, %c0_5] : memref<1x8x128xf32, #tpu.memory_space<vmem>>, vector<1x8x128xf32>
      %15 = vector.shape_cast %14 : vector<1x8x128xf32> to vector<8x128xf32>
      %16 = vector.shape_cast %13 : vector<8x128xf32> to vector<1x8x128xf32>
      tpu.vector_store %arg4[%c0, %c0_4, %c0_5], %16 {strides = array<i32>} : memref<1x8x128xf32, #tpu.memory_space<vmem>>, vector<1x8x128xf32>,
      %c0_6 = arith.constant 0 : index
      %c0_7 = arith.constant 0 : index
      %c0_8 = arith.constant 0 : index
      %17 = vector.load %arg5[%c0_6, %c0_7, %c0_8] : memref<1x8x128xf32, #tpu.memory_space<vmem>>, vector<1x8x128xf32>
      %18 = vector.shape_cast %17 : vector<1x8x128xf32> to vector<8x128xf32>
      %19 = vector.shape_cast %13 : vector<8x128xf32> to vector<1x8x128xf32>
      tpu.vector_store %arg5[%c0_6, %c0_7, %c0_8], %19 {strides = array<i32>} : memref<1x8x128xf32, #tpu.memory_space<vmem>>, vector<1x8x128xf32>,
      %c0_9 = arith.constant 0 : index
      %c0_10 = arith.constant 0 : index
      %c0_11 = arith.constant 0 : index
      %20 = vector.load %arg6[%c0_9, %c0_10, %c0_11] : memref<1x8x128xf32, #tpu.memory_space<vmem>>, vector<1x8x128xf32>
      %21 = vector.shape_cast %20 : vector<1x8x128xf32> to vector<8x128xf32>
      %22 = vector.shape_cast %13 : vector<8x128xf32> to vector<1x8x128xf32>
      tpu.vector_store %arg6[%c0_9, %c0_10, %c0_11], %22 {strides = array<i32>} : memref<1x8x128xf32, #tpu.memory_space<vmem>>, vector<1x8x128xf32>,
    } else {
    }
    %c1_i32 = arith.constant 1 : i32
    %3 = arith.muli %arg0, %c1_i32 : i32
    %4 = arith.addi %3, %arg1 : i32
    %c4096_i32 = arith.constant 4096 : i32
    %5 = arith.muli %4, %c4096_i32 : i32
    %c4096_i32_1 = arith.constant 4096 : i32
    %6 = arith.addi %5, %c4096_i32_1 : i32
    %c512_i32 = arith.constant 512 : i32
    %7 = arith.cmpi sle, %6, %c512_i32 : i32
    %8 = arith.extui %7 : i1 to i32
    %c0_i32_2 = arith.constant 0 : i32
    %9 = arith.cmpi ne, %8, %c0_i32_2 : i32
    scf.if %9 {
      %cst = arith.constant 0.000000e+00 : f32
      %13 = vector.broadcast %cst : f32 to vector<8x128xf32>
      %c0_i32_4 = arith.constant 0 : i32
      %c32_i32 = arith.constant 32 : i32
      %14 = arith.muli %c0_i32_4, %c32_i32 : i32
      %15 = tpu.assume_multiple %14, 32 : i32
      %16 = arith.index_cast %15 : i32 to index
      %c0 = arith.constant 0 : index
      %17 = vector.load %arg2[%16, %c0] : memref<32x128xf32, #tpu.memory_space<vmem>>, vector<32x128xf32>
      %18 = arith.index_cast %15 : i32 to index
      %c0_5 = arith.constant 0 : index
      %19 = vector.load %arg3[%18, %c0_5] : memref<32x128xf32, #tpu.memory_space<vmem>>, vector<32x128xf32>
      %cst_6 = arith.constant 1.000000e+00 : f32
      %20 = vector.broadcast %cst_6 : f32 to vector<32x128xf32>
      %21 = arith.cmpf oeq, %19, %20 : vector<32x128xf32>
      %cst_7 = arith.constant 1.000000e+00 : f32
      %22 = vector.broadcast %cst_7 : f32 to vector<32x128xf32>
      %23 = arith.subf %22, %17 : vector<32x128xf32>
      %24 = arith.select %21, %17, %23 : vector<32x128xi1>, vector<32x128xf32>
      %cst_8 = arith.constant 0.699999988 : f32
      %cst_9 = arith.constant 3.000000e-01 : f32
      %25 = vector.broadcast %cst_8 : f32 to vector<32x128xf32>
      %26 = vector.broadcast %cst_9 : f32 to vector<32x128xf32>
      %27 = arith.select %21, %25, %26 : vector<32x128xi1>, vector<32x128xf32>
      %28 = math.log %24 : vector<32x128xf32>
      %cst_10 = arith.constant -1.000000e+02 : f32
      %29 = vector.broadcast %cst_10 : f32 to vector<32x128xf32>
      %30 = arith.maximumf %28, %29 : vector<32x128xf32>
      %cst_11 = arith.constant 0.000000e+00 : f32
      %31 = vector.broadcast %cst_11 : f32 to vector<32x128xf32>
      %32 = arith.subf %31, %30 : vector<32x128xf32>
      %cst_12 = arith.constant 1.000000e+00 : f32
      %33 = vector.broadcast %cst_12 : f32 to vector<32x128xf32>
      %34 = arith.subf %33, %24 : vector<32x128xf32>
      %35 = arith.mulf %34, %34 : vector<32x128xf32>
      %36 = arith.mulf %27, %35 : vector<32x128xf32>
      %37 = arith.mulf %36, %32 : vector<32x128xf32>
      %38 = vector.shape_cast %37 : vector<32x128xf32> to vector<4x8x128xf32>
      %cst_13 = arith.constant dense<0.000000e+00> : vector<8x128xf32>
      %39 = vector.multi_reduction <add>, %38, %cst_13 [0] : vector<4x8x128xf32> to vector<8x128xf32>
      %40 = arith.addf %13, %39 : vector<8x128xf32>
      %41 = arith.addf %17, %19 : vector<32x128xf32>
      %42 = vector.shape_cast %41 : vector<32x128xf32> to vector<4x8x128xf32>
      %cst_14 = arith.constant dense<0.000000e+00> : vector<8x128xf32>
      %43 = vector.multi_reduction <add>, %42, %cst_14 [0] : vector<4x8x128xf32> to vector<8x128xf32>
      %44 = arith.addf %13, %43 : vector<8x128xf32>
      %45 = arith.mulf %17, %19 : vector<32x128xf32>
      %46 = vector.shape_cast %45 : vector<32x128xf32> to vector<4x8x128xf32>
      %cst_15 = arith.constant dense<0.000000e+00> : vector<8x128xf32>
      %47 = vector.multi_reduction <add>, %46, %cst_15 [0] : vector<4x8x128xf32> to vector<8x128xf32>
      %48 = arith.addf %13, %47 : vector<8x128xf32>
      %c1_i32_16 = arith.constant 1 : i32
      %c0_17 = arith.constant 0 : index
      %c0_18 = arith.constant 0 : index
      %c0_19 = arith.constant 0 : index
      %49 = vector.load %arg4[%c0_17, %c0_18, %c0_19] : memref<1x8x128xf32, #tpu.memory_space<vmem>>, vector<1x8x128xf32>
      %50 = vector.shape_cast %49 : vector<1x8x128xf32> to vector<8x128xf32>
      %51 = arith.addf %50, %40 : vector<8x128xf32>
      %c0_20 = arith.constant 0 : index
      %c0_21 = arith.constant 0 : index
      %c0_22 = arith.constant 0 : index
      %52 = vector.load %arg4[%c0_20, %c0_21, %c0_22] : memref<1x8x128xf32, #tpu.memory_space<vmem>>, vector<1x8x128xf32>
      %53 = vector.shape_cast %52 : vector<1x8x128xf32> to vector<8x128xf32>
      %54 = vector.shape_cast %51 : vector<8x128xf32> to vector<1x8x128xf32>
      tpu.vector_store %arg4[%c0_20, %c0_21, %c0_22], %54 {strides = array<i32>} : memref<1x8x128xf32, #tpu.memory_space<vmem>>, vector<1x8x128xf32>,
      %c0_23 = arith.constant 0 : index
      %c0_24 = arith.constant 0 : index
      %c0_25 = arith.constant 0 : index
      %55 = vector.load %arg5[%c0_23, %c0_24, %c0_25] : memref<1x8x128xf32, #tpu.memory_space<vmem>>, vector<1x8x128xf32>
      %56 = vector.shape_cast %55 : vector<1x8x128xf32> to vector<8x128xf32>
      %57 = arith.addf %56, %44 : vector<8x128xf32>
      %c0_26 = arith.constant 0 : index
      %c0_27 = arith.constant 0 : index
      %c0_28 = arith.constant 0 : index
      %58 = vector.load %arg5[%c0_26, %c0_27, %c0_28] : memref<1x8x128xf32, #tpu.memory_space<vmem>>, vector<1x8x128xf32>
      %59 = vector.shape_cast %58 : vector<1x8x128xf32> to vector<8x128xf32>
      %60 = vector.shape_cast %57 : vector<8x128xf32> to vector<1x8x128xf32>
      tpu.vector_store %arg5[%c0_26, %c0_27, %c0_28], %60 {strides = array<i32>} : memref<1x8x128xf32, #tpu.memory_space<vmem>>, vector<1x8x128xf32>,
      %c0_29 = arith.constant 0 : index
      %c0_30 = arith.constant 0 : index
      %c0_31 = arith.constant 0 : index
      %61 = vector.load %arg6[%c0_29, %c0_30, %c0_31] : memref<1x8x128xf32, #tpu.memory_space<vmem>>, vector<1x8x128xf32>
      %62 = vector.shape_cast %61 : vector<1x8x128xf32> to vector<8x128xf32>
      %63 = arith.addf %62, %48 : vector<8x128xf32>
      %c0_32 = arith.constant 0 : index
      %c0_33 = arith.constant 0 : index
      %c0_34 = arith.constant 0 : index
      %64 = vector.load %arg6[%c0_32, %c0_33, %c0_34] : memref<1x8x128xf32, #tpu.memory_space<vmem>>, vector<1x8x128xf32>
      %65 = vector.shape_cast %64 : vector<1x8x128xf32> to vector<8x128xf32>
      %66 = vector.shape_cast %63 : vector<8x128xf32> to vector<1x8x128xf32>
      tpu.vector_store %arg6[%c0_32, %c0_33, %c0_34], %66 {strides = array<i32>} : memref<1x8x128xf32, #tpu.memory_space<vmem>>, vector<1x8x128xf32>,
    } else {
    }
    %true = arith.constant true
    %10 = arith.xori %7, %true : i1
    %11 = arith.extui %10 : i1 to i32
    %c0_i32_3 = arith.constant 0 : i32
    %12 = arith.cmpi ne, %11, %c0_i32_3 : i32
    scf.if %12 {
      %cst = arith.constant 0.000000e+00 : f32
      %13 = vector.broadcast %cst : f32 to vector<8x128xf32>
      %c0_i32_4 = arith.constant 0 : i32
      %c32_i32 = arith.constant 32 : i32
      %14 = arith.muli %c0_i32_4, %c32_i32 : i32
      %15 = tpu.assume_multiple %14, 32 : i32
      %16 = arith.index_cast %15 : i32 to index
      %c0 = arith.constant 0 : index
      %17 = vector.load %arg2[%16, %c0] : memref<32x128xf32, #tpu.memory_space<vmem>>, vector<32x128xf32>
      %18 = arith.index_cast %15 : i32 to index
      %c0_5 = arith.constant 0 : index
      %19 = vector.load %arg3[%18, %c0_5] : memref<32x128xf32, #tpu.memory_space<vmem>>, vector<32x128xf32>
      %20 = tpu.iota {dimensions = array<i32: 0>} : vector<32x128xi32>
      %21 = tpu.iota {dimensions = array<i32: 1>} : vector<32x128xi32>
      %22 = vector.broadcast %15 : i32 to vector<32x128xi32>
      %23 = arith.addi %22, %20 : vector<32x128xi32>
      %c128_i32 = arith.constant 128 : i32
      %24 = vector.broadcast %c128_i32 : i32 to vector<32x128xi32>
      %25 = arith.muli %23, %24 : vector<32x128xi32>
      %26 = vector.broadcast %5 : i32 to vector<32x128xi32>
      %27 = arith.addi %26, %25 : vector<32x128xi32>
      %28 = arith.addi %27, %21 : vector<32x128xi32>
      %c512_i32_6 = arith.constant 512 : i32
      %29 = vector.broadcast %c512_i32_6 : i32 to vector<32x128xi32>
      %30 = arith.cmpi slt, %28, %29 : vector<32x128xi32>
      %cst_7 = arith.constant 0.000000e+00 : f32
      %31 = vector.broadcast %cst_7 : f32 to vector<32x128xf32>
      %32 = arith.select %30, %17, %31 : vector<32x128xi1>, vector<32x128xf32>
      %cst_8 = arith.constant 0.000000e+00 : f32
      %33 = vector.broadcast %cst_8 : f32 to vector<32x128xf32>
      %34 = arith.select %30, %19, %33 : vector<32x128xi1>, vector<32x128xf32>
      %cst_9 = arith.constant 1.000000e+00 : f32
      %35 = vector.broadcast %cst_9 : f32 to vector<32x128xf32>
      %36 = arith.cmpf oeq, %34, %35 : vector<32x128xf32>
      %cst_10 = arith.constant 1.000000e+00 : f32
      %37 = vector.broadcast %cst_10 : f32 to vector<32x128xf32>
      %38 = arith.subf %37, %32 : vector<32x128xf32>
      %39 = arith.select %36, %32, %38 : vector<32x128xi1>, vector<32x128xf32>
      %cst_11 = arith.constant 0.699999988 : f32
      %cst_12 = arith.constant 3.000000e-01 : f32
      %40 = vector.broadcast %cst_11 : f32 to vector<32x128xf32>
      %41 = vector.broadcast %cst_12 : f32 to vector<32x128xf32>
      %42 = arith.select %36, %40, %41 : vector<32x128xi1>, vector<32x128xf32>
      %43 = math.log %39 : vector<32x128xf32>
      %cst_13 = arith.constant -1.000000e+02 : f32
      %44 = vector.broadcast %cst_13 : f32 to vector<32x128xf32>
      %45 = arith.maximumf %43, %44 : vector<32x128xf32>
      %cst_14 = arith.constant 0.000000e+00 : f32
      %46 = vector.broadcast %cst_14 : f32 to vector<32x128xf32>
      %47 = arith.subf %46, %45 : vector<32x128xf32>
      %cst_15 = arith.constant 1.000000e+00 : f32
      %48 = vector.broadcast %cst_15 : f32 to vector<32x128xf32>
      %49 = arith.subf %48, %39 : vector<32x128xf32>
      %50 = arith.mulf %49, %49 : vector<32x128xf32>
      %51 = arith.mulf %42, %50 : vector<32x128xf32>
      %52 = arith.mulf %51, %47 : vector<32x128xf32>
      %53 = vector.shape_cast %52 : vector<32x128xf32> to vector<4x8x128xf32>
      %cst_16 = arith.constant dense<0.000000e+00> : vector<8x128xf32>
      %54 = vector.multi_reduction <add>, %53, %cst_16 [0] : vector<4x8x128xf32> to vector<8x128xf32>
      %55 = arith.addf %13, %54 : vector<8x128xf32>
      %56 = arith.addf %32, %34 : vector<32x128xf32>
      %57 = vector.shape_cast %56 : vector<32x128xf32> to vector<4x8x128xf32>
      %cst_17 = arith.constant dense<0.000000e+00> : vector<8x128xf32>
      %58 = vector.multi_reduction <add>, %57, %cst_17 [0] : vector<4x8x128xf32> to vector<8x128xf32>
      %59 = arith.addf %13, %58 : vector<8x128xf32>
      %60 = arith.mulf %32, %34 : vector<32x128xf32>
      %61 = vector.shape_cast %60 : vector<32x128xf32> to vector<4x8x128xf32>
      %cst_18 = arith.constant dense<0.000000e+00> : vector<8x128xf32>
      %62 = vector.multi_reduction <add>, %61, %cst_18 [0] : vector<4x8x128xf32> to vector<8x128xf32>
      %63 = arith.addf %13, %62 : vector<8x128xf32>
      %c1_i32_19 = arith.constant 1 : i32
      %c0_20 = arith.constant 0 : index
      %c0_21 = arith.constant 0 : index
      %c0_22 = arith.constant 0 : index
      %64 = vector.load %arg4[%c0_20, %c0_21, %c0_22] : memref<1x8x128xf32, #tpu.memory_space<vmem>>, vector<1x8x128xf32>
      %65 = vector.shape_cast %64 : vector<1x8x128xf32> to vector<8x128xf32>
      %66 = arith.addf %65, %55 : vector<8x128xf32>
      %c0_23 = arith.constant 0 : index
      %c0_24 = arith.constant 0 : index
      %c0_25 = arith.constant 0 : index
      %67 = vector.load %arg4[%c0_23, %c0_24, %c0_25] : memref<1x8x128xf32, #tpu.memory_space<vmem>>, vector<1x8x128xf32>
      %68 = vector.shape_cast %67 : vector<1x8x128xf32> to vector<8x128xf32>
      %69 = vector.shape_cast %66 : vector<8x128xf32> to vector<1x8x128xf32>
      tpu.vector_store %arg4[%c0_23, %c0_24, %c0_25], %69 {strides = array<i32>} : memref<1x8x128xf32, #tpu.memory_space<vmem>>, vector<1x8x128xf32>,
      %c0_26 = arith.constant 0 : index
      %c0_27 = arith.constant 0 : index
      %c0_28 = arith.constant 0 : index
      %70 = vector.load %arg5[%c0_26, %c0_27, %c0_28] : memref<1x8x128xf32, #tpu.memory_space<vmem>>, vector<1x8x128xf32>
      %71 = vector.shape_cast %70 : vector<1x8x128xf32> to vector<8x128xf32>
      %72 = arith.addf %71, %59 : vector<8x128xf32>
      %c0_29 = arith.constant 0 : index
      %c0_30 = arith.constant 0 : index
      %c0_31 = arith.constant 0 : index
      %73 = vector.load %arg5[%c0_29, %c0_30, %c0_31] : memref<1x8x128xf32, #tpu.memory_space<vmem>>, vector<1x8x128xf32>
      %74 = vector.shape_cast %73 : vector<1x8x128xf32> to vector<8x128xf32>
      %75 = vector.shape_cast %72 : vector<8x128xf32> to vector<1x8x128xf32>
      tpu.vector_store %arg5[%c0_29, %c0_30, %c0_31], %75 {strides = array<i32>} : memref<1x8x128xf32, #tpu.memory_space<vmem>>, vector<1x8x128xf32>,
      %c0_32 = arith.constant 0 : index
      %c0_33 = arith.constant 0 : index
      %c0_34 = arith.constant 0 : index
      %76 = vector.load %arg6[%c0_32, %c0_33, %c0_34] : memref<1x8x128xf32, #tpu.memory_space<vmem>>, vector<1x8x128xf32>
      %77 = vector.shape_cast %76 : vector<1x8x128xf32> to vector<8x128xf32>
      %78 = arith.addf %77, %63 : vector<8x128xf32>
      %c0_35 = arith.constant 0 : index
      %c0_36 = arith.constant 0 : index
      %c0_37 = arith.constant 0 : index
      %79 = vector.load %arg6[%c0_35, %c0_36, %c0_37] : memref<1x8x128xf32, #tpu.memory_space<vmem>>, vector<1x8x128xf32>
      %80 = vector.shape_cast %79 : vector<1x8x128xf32> to vector<8x128xf32>
      %81 = vector.shape_cast %78 : vector<8x128xf32> to vector<1x8x128xf32>
      tpu.vector_store %arg6[%c0_35, %c0_36, %c0_37], %81 {strides = array<i32>} : memref<1x8x128xf32, #tpu.memory_space<vmem>>, vector<1x8x128xf32>,
    } else {
    }
    return
  }
  func.func @transform_0(%arg0: i32, %arg1: i32) -> (i32, i32) {
    %c1_i32 = arith.constant 1 : i32
    %0 = arith.muli %arg0, %c1_i32 : i32
    %1 = arith.addi %0, %arg1 : i32
    %c0_i32 = arith.constant 0 : i32
    %2 = arith.minsi %1, %c0_i32 : i32
    %c0_i32_0 = arith.constant 0 : i32
    %c0_i32_1 = arith.constant 0 : i32
    return %2, %c0_i32_0 : i32, i32
  }
  func.func @transform_1(%arg0: i32, %arg1: i32) -> (i32, i32) {
    %c1_i32 = arith.constant 1 : i32
    %0 = arith.muli %arg0, %c1_i32 : i32
    %1 = arith.addi %0, %arg1 : i32
    %c0_i32 = arith.constant 0 : i32
    %2 = arith.minsi %1, %c0_i32 : i32
    %c0_i32_0 = arith.constant 0 : i32
    %c0_i32_1 = arith.constant 0 : i32
    return %2, %c0_i32_0 : i32, i32
  }
  func.func @transform_2(%arg0: i32, %arg1: i32) -> (i32, i32, i32) {
    %c0_i32 = arith.constant 0 : i32
    %c0_i32_0 = arith.constant 0 : i32
    %c0_i32_1 = arith.constant 0 : i32
    return %arg0, %c0_i32, %c0_i32_0 : i32, i32, i32
  }
  func.func @transform_3(%arg0: i32, %arg1: i32) -> (i32, i32, i32) {
    %c0_i32 = arith.constant 0 : i32
    %c0_i32_0 = arith.constant 0 : i32
    %c0_i32_1 = arith.constant 0 : i32
    return %arg0, %c0_i32, %c0_i32_0 : i32, i32, i32
  }
  func.func @transform_4(%arg0: i32, %arg1: i32) -> (i32, i32, i32) {
    %c0_i32 = arith.constant 0 : i32
    %c0_i32_0 = arith.constant 0 : i32
    %c0_i32_1 = arith.constant 0 : i32
    return %arg0, %c0_i32, %c0_i32_0 : i32, i32, i32
  }
}

</mosaic_0001>

<llo_original>
// kernel: tpu_custom_call.1
$region0: #{tpu_custom_call.1}
  #allocation0 [shape = 'u32[]', space=smem, size = 0x4, offset = 0x4, fixed_abs, tag = 'smem constant byte address 0x4 - core index']
  #allocation1 [shape = 'u32[72,128]{1,0:T(1,128)}', space=vmem, size = 0x9000, scoped, tag = 'internal scratch']
  %s0 = inlined_call_operand.hbm [shape: f32[4,128], index: 0, kind: input, shape index: {}]
  %s1 = inlined_call_operand.hbm [shape: f32[4,128], index: 1, kind: input, shape index: {}]
  %s2 = inlined_call_operand.hbm [shape: f32[1,8,128], index: 2, kind: output, shape index: {0}]
  %s3 = inlined_call_operand.hbm [shape: f32[1,8,128], index: 3, kind: output, shape index: {1}]
  %s4 = inlined_call_operand.hbm [shape: f32[1,8,128], index: 4, kind: output, shape index: {2}]
  %5 = xla_tuple %s2, %s3, %s4
  %s6 = sld [smem:[#allocation0]]
  $region54: #{tpu_custom_call.1} parent=0
    _
  %s8 = ssub.s32 1, %s6
  %s9 = scalar_select 0, %s8, %s6
  $region1: #{tpu_custom_call.1} parent=0
    #allocation2 [shape = 'u8[16384]{0}', space=vmem, size = 0x4000, scoped, tag = 'input window, operand 0, single buffered']
    #allocation3 [shape = 's32[1]{0}', space=sflag, size = 0x4, scoped, tag = 'scoped memory for tpu_custom_call.1']
    #allocation4 [shape = 's32[1]{0}', space=sflag, size = 0x4, scoped, tag = 'scoped memory for tpu_custom_call.1']
    #allocation5 [shape = 'u8[16384]{0}', space=vmem, size = 0x4000, scoped, tag = 'input window, operand 1, single buffered']
    #allocation6 [shape = 's32[1]{0}', space=sflag, size = 0x4, scoped, tag = 'scoped memory for tpu_custom_call.1']
    #allocation7 [shape = 'u8[4096]{0}', space=vmem, size = 0x1000, scoped, tag = 'output window, operand 0, single buffered']
    #allocation8 [shape = 'u8[4096]{0}', space=vmem, size = 0x1000, scoped, tag = 'output window, operand 1, single buffered']
    #allocation9 [shape = 's32[1]{0}', space=sflag, size = 0x4, scoped, tag = 'scoped memory for tpu_custom_call.1']
    #allocation10 [shape = 'u8[4096]{0}', space=vmem, size = 0x1000, scoped, tag = 'output window, operand 2, single buffered']
    %10 = vsyncpa [#allocation3], 0
    %11 = vsyncpa [#allocation6], 0
    %12 = vsyncpa [#allocation4], 0
    %13 = vsyncpa [#allocation9], 0
    // Predicated region
    $region2: #{tpu_custom_call.1} parent=1 // pred_check
      _
    $region3: #{tpu_custom_call.1} parent=1 // pred_check_branch
      %15 = sbr.rel (0) target = $region5
    $region4: #{tpu_custom_call.1} parent=1 // pred_region
      %s16 = sadd.s32 0, 0
      %p17 = scmp.lt.s32.totalorder %s16, 0
      %s18 = scalar_select %p17, %s16, 0
      %s19 = smul.u32 8, %s18
      %s20 = ssub.s32 1, %s19
      %s21 = smul.u32 4, %s20
      %s22 = ssub.s32 32, %s21
      %s23 = sshll.u32 %s22, 4
      %24 = vsyncadd [#allocation3], %s23
      %p25 = scmp.ne.s32.totalorder 0, %s21
      %s26 = smul.addr %s19, 4
      %s27 = scalar_lea.hbm %s0, %s26
      %s28 = smul.u32 4, %s20
      %s29 = sshll.u32 %s27, 4
      %s30 = int_to_ptr.hbm [resolvable:$true] %s29
      %s31 = sshll.u32 [#allocation2], 4
      %s32 = int_to_ptr.vmem [resolvable:$true] %s31
      %s33 = sshll.u32 %s28, 4
      %37 = dma.hbm_to_vmem [thread:$0]  (%p25), %s30, %s33, %s32, [#allocation3], 64, 64, 4
    $region5: #{tpu_custom_call.1} parent=1 // pred_fallthru
      _
    // Predicated region
    $region6: #{tpu_custom_call.1} parent=1 // pred_check
      _
    $region7: #{tpu_custom_call.1} parent=1 // pred_check_branch
      %39 = sbr.rel (0) target = $region9
    $region8: #{tpu_custom_call.1} parent=1 // pred_region
      %s40 = sadd.s32 0, 0
      %p41 = scmp.lt.s32.totalorder %s40, 0
      %s42 = scalar_select %p41, %s40, 0
      %s43 = smul.u32 8, %s42
      %s44 = ssub.s32 1, %s43
      %s45 = smul.u32 4, %s44
      %s46 = ssub.s32 32, %s45
      %s47 = sshll.u32 %s46, 4
      %48 = vsyncadd [#allocation6], %s47
      %p49 = scmp.ne.s32.totalorder 0, %s45
      %s50 = smul.addr %s43, 4
      %s51 = scalar_lea.hbm %s1, %s50
      %s52 = smul.u32 4, %s44
      %s53 = sshll.u32 %s51, 4
      %s54 = int_to_ptr.hbm [resolvable:$true] %s53
      %s55 = sshll.u32 [#allocation5], 4
      %s56 = int_to_ptr.vmem [resolvable:$true] %s55
      %s57 = sshll.u32 %s52, 4
      %61 = dma.hbm_to_vmem [thread:$0]  (%p49), %s54, %s57, %s56, [#allocation6], 64, 64, 4
    $region9: #{tpu_custom_call.1} parent=1 // pred_fallthru
      _
    // Predicated region
    $region10: #{tpu_custom_call.1} parent=1 // pred_check
      _
    $region11: #{tpu_custom_call.1} parent=1 // pred_check_branch
      %63 = sbr.rel (0) target = $region13
    $region12: #{tpu_custom_call.1} parent=1 // pred_region
      %65 = dma.done [#allocation3], 512
    $region13: #{tpu_custom_call.1} parent=1 // pred_fallthru
      _
    // Predicated region
    $region14: #{tpu_custom_call.1} parent=1 // pred_check
      _
    $region15: #{tpu_custom_call.1} parent=1 // pred_check_branch
      %67 = sbr.rel (0) target = $region17
    $region16: #{tpu_custom_call.1} parent=1 // pred_region
      %69 = dma.done [#allocation6], 512
    $region17: #{tpu_custom_call.1} parent=1 // pred_fallthru
      _
    %s70 = sadd.s32 0, 0
    %p71 = scmp.lt.s32.totalorder %s70, 0
    %s72 = scalar_select %p71, %s70, 0
    %s73 = smul.u32 8, %s72
    %s74 = ssub.s32 1, %s73
    %s75 = smul.u32 4, %s74
    %s76 = sadd.s32 0, 0
    %p77 = scmp.lt.s32.totalorder %s76, 0
    %s78 = scalar_select %p77, %s76, 0
    %s79 = smul.u32 8, %s78
    %s80 = ssub.s32 1, %s79
    %s81 = smul.u32 4, %s80
    %p82 = scmp.eq.s32.totalorder 0, 0
    // Predicated region
    $region18: #{tpu_custom_call.1} parent=1 // pred_check
      %p83 = pneg %p82
    $region19: #{tpu_custom_call.1} parent=1 // pred_check_branch
      %85 = sbr.rel (%p83) target = $region21
    $region20: #{tpu_custom_call.1} parent=1 // pred_region
      %86 = vst [vmem:[#allocation7] sm:$0xff] 0.0
      %87 = vst [vmem:[#allocation8] sm:$0xff] 0.0
      %88 = vst [vmem:[#allocation10] sm:$0xff] 0.0
    $region21: #{tpu_custom_call.1} parent=1 // pred_fallthru
      _
    %s89 = sadd.s32 0, 0
    %s90 = smul.u32 %s89, 4096
    %s91 = sadd.s32 %s90, 4096
    %p92 = scmp.le.s32.totalorder %s91, 512
    // Predicated region
    $region22: #{tpu_custom_call.1} parent=1 // pred_check
      %p93 = pneg %p92
    $region23: #{tpu_custom_call.1} parent=1 // pred_check_branch
      %95 = sbr.rel (%p93) target = $region25
    $region24: #{tpu_custom_call.1} parent=1 // pred_region
      %v96 = vld [vmem:[#allocation2] sm:$0xff]
      %v97 = vld [vmem:[#allocation2 + $0x8] sm:$0xff]
      %v98 = vld [vmem:[#allocation2 + $0x10] sm:$0xff]
      %v99 = vld [vmem:[#allocation2 + $0x18] sm:$0xff]
      %v100 = vld [vmem:[#allocation5] sm:$0xff]
      %v101 = vld [vmem:[#allocation5 + $0x8] sm:$0xff]
      %v102 = vld [vmem:[#allocation5 + $0x10] sm:$0xff]
      %v103 = vld [vmem:[#allocation5 + $0x18] sm:$0xff]
      %vm104 = vcmp.eq.f32.partialorder %v100, 1.0
      %vm105 = vcmp.eq.f32.partialorder %v101, 1.0
      %vm106 = vcmp.eq.f32.partialorder %v102, 1.0
      %vm107 = vcmp.eq.f32.partialorder %v103, 1.0
      %v108 = vsub.f32 1.0, %v96
      %v109 = vsub.f32 1.0, %v97
      %v110 = vsub.f32 1.0, %v98
      %v111 = vsub.f32 1.0, %v99
      %v112 = vsel %vm104, %v96, %v108
      %v113 = vsel %vm105, %v97, %v109
      %v114 = vsel %vm106, %v98, %v110
      %v115 = vsel %vm107, %v99, %v111
      %v116 = vsel %vm104, 0.7, 0.3
      %v117 = vsel %vm105, 0.7, 0.3
      %v118 = vsel %vm106, 0.7, 0.3
      %v119 = vsel %vm107, 0.7, 0.3
      %v120 = vlog2.pop %v112
      %v121 = vmul.f32 %v120, 0.6931472
      %v122 = vlog2.pop %v113
      %v123 = vmul.f32 %v122, 0.6931472
      %v124 = vlog2.pop %v114
      %v125 = vmul.f32 %v124, 0.6931472
      %v126 = vlog2.pop %v115
      %v127 = vmul.f32 %v126, 0.6931472
      %v128 = vmax.f32 %v121, -100.0
      %v129 = vmax.f32 %v123, -100.0
      %v130 = vmax.f32 %v125, -100.0
      %v131 = vmax.f32 %v127, -100.0
      %v132 = vsub.f32 0.0, %v128
      %v133 = vsub.f32 0.0, %v129
      %v134 = vsub.f32 0.0, %v130
      %v135 = vsub.f32 0.0, %v131
      %v136 = vsub.f32 1.0, %v112
      %v137 = vsub.f32 1.0, %v113
      %v138 = vsub.f32 1.0, %v114
      %v139 = vsub.f32 1.0, %v115
      %v140 = vmul.f32 %v136, %v136
      %v141 = vmul.f32 %v137, %v137
      %v142 = vmul.f32 %v138, %v138
      %v143 = vmul.f32 %v139, %v139
      %v144 = vmul.f32 %v116, %v140
      %v145 = vmul.f32 %v117, %v141
      %v146 = vmul.f32 %v118, %v142
      %v147 = vmul.f32 %v119, %v143
      %v148 = vmul.f32 %v144, %v132
      %v149 = vmul.f32 %v145, %v133
      %v150 = vmul.f32 %v146, %v134
      %v151 = vmul.f32 %v147, %v135
      %v152 = vadd.f32 %v148, %v149
      %v153 = vadd.f32 %v152, %v150
      %v154 = vadd.f32 %v153, %v151
      %v155 = vadd.f32 %v154, 0.0
      %v156 = vadd.f32 %v96, %v100
      %v157 = vadd.f32 %v97, %v101
      %v158 = vadd.f32 %v98, %v102
      %v159 = vadd.f32 %v99, %v103
      %v160 = vadd.f32 %v156, %v157
      %v161 = vadd.f32 %v160, %v158
      %v162 = vadd.f32 %v161, %v159
      %v163 = vadd.f32 %v162, 0.0
      %v164 = vmul.f32 %v96, %v100
      %v165 = vmul.f32 %v97, %v101
      %v166 = vmul.f32 %v98, %v102
      %v167 = vmul.f32 %v99, %v103
      %v168 = vadd.f32 %v164, %v165
      %v169 = vadd.f32 %v168, %v166
      %v170 = vadd.f32 %v169, %v167
      %v171 = vadd.f32 %v170, 0.0
      %v172 = vld [vmem:[#allocation7] sm:$0xff]
      %v173 = vadd.f32 %v172, %v155
      %174 = vst [vmem:[#allocation7] sm:$0xff] %v173
      %v175 = vld [vmem:[#allocation8] sm:$0xff]
      %v176 = vadd.f32 %v175, %v163
      %177 = vst [vmem:[#allocation8] sm:$0xff] %v176
      %v178 = vld [vmem:[#allocation10] sm:$0xff]
      %v179 = vadd.f32 %v178, %v171
      %180 = vst [vmem:[#allocation10] sm:$0xff] %v179
    $region25: #{tpu_custom_call.1} parent=1 // pred_fallthru
      _
    %p181 = scmp.gt.s32.totalorder %s91, 512
    // Predicated region
    $region26: #{tpu_custom_call.1} parent=1 // pred_check
      %p182 = pneg %p181
    $region27: #{tpu_custom_call.1} parent=1 // pred_check_branch
      %184 = sbr.rel (%p182) target = $region29
    $region28: #{tpu_custom_call.1} parent=1 // pred_region
      %v185 = vld [vmem:[#allocation2] sm:$0xff]
      %v186 = vld [vmem:[#allocation2 + $0x8] sm:$0xff]
      %v187 = vld [vmem:[#allocation2 + $0x10] sm:$0xff]
      %v188 = vld [vmem:[#allocation2 + $0x18] sm:$0xff]
      %v189 = vld [vmem:[#allocation5] sm:$0xff]
      %v190 = vld [vmem:[#allocation5 + $0x8] sm:$0xff]
      %v191 = vld [vmem:[#allocation5 + $0x10] sm:$0xff]
      %v192 = vld [vmem:[#allocation5 + $0x18] sm:$0xff]
      %v193 = vlaneseq
      %v194 = vshrl.u32 %v193, 7
      %v195 = vadd.s32 %v194, 8
      %v196 = vadd.s32 %v194, 16
      %v197 = vadd.s32 %v194, 24
      %v198 = vlaneseq
      %v199 = vand.u32 %v198, 127
      %v200 = vstv 0
      %v201 = vadd.s32 %v200, %v194
      %v202 = vadd.s32 %v200, %v195
      %v203 = vadd.s32 %v200, %v196
      %v204 = vadd.s32 %v200, %v197
      %v205 = vmul.u32 %v201, 128
      %v206 = vmul.u32 %v202, 128
      %v207 = vmul.u32 %v203, 128
      %v208 = vmul.u32 %v204, 128
      %v209 = vstv %s90
      %v210 = vadd.s32 %v209, %v205
      %v211 = vadd.s32 %v209, %v206
      %v212 = vadd.s32 %v209, %v207
      %v213 = vadd.s32 %v209, %v208
      %v214 = vadd.s32 %v210, %v199
      %v215 = vadd.s32 %v211, %v199
      %v216 = vadd.s32 %v212, %v199
      %v217 = vadd.s32 %v213, %v199
      %vm218 = vcmp.lt.s32.totalorder %v214, 512
      %vm219 = vcmp.lt.s32.totalorder %v215, 512
      %vm220 = vcmp.lt.s32.totalorder %v216, 512
      %vm221 = vcmp.lt.s32.totalorder %v217, 512
      %v222 = vsel %vm218, %v185, 0.0
      %v223 = vsel %vm219, %v186, 0.0
      %v224 = vsel %vm220, %v187, 0.0
      %v225 = vsel %vm221, %v188, 0.0
      %v226 = vsel %vm218, %v189, 0.0
      %v227 = vsel %vm219, %v190, 0.0
      %v228 = vsel %vm220, %v191, 0.0
      %v229 = vsel %vm221, %v192, 0.0
      %vm230 = vcmp.eq.f32.partialorder %v226, 1.0
      %vm231 = vcmp.eq.f32.partialorder %v227, 1.0
      %vm232 = vcmp.eq.f32.partialorder %v228, 1.0
      %vm233 = vcmp.eq.f32.partialorder %v229, 1.0
      %v234 = vsub.f32 1.0, %v222
      %v235 = vsub.f32 1.0, %v223
      %v236 = vsub.f32 1.0, %v224
      %v237 = vsub.f32 1.0, %v225
      %v238 = vsel %vm230, %v222, %v234
      %v239 = vsel %vm231, %v223, %v235
      %v240 = vsel %vm232, %v224, %v236
      %v241 = vsel %vm233, %v225, %v237
      %v242 = vsel %vm230, 0.7, 0.3
      %v243 = vsel %vm231, 0.7, 0.3
      %v244 = vsel %vm232, 0.7, 0.3
      %v245 = vsel %vm233, 0.7, 0.3
      %v246 = vlog2.pop %v238
      %v247 = vmul.f32 %v246, 0.6931472
      %v248 = vlog2.pop %v239
      %v249 = vmul.f32 %v248, 0.6931472
      %v250 = vlog2.pop %v240
      %v251 = vmul.f32 %v250, 0.6931472
      %v252 = vlog2.pop %v241
      %v253 = vmul.f32 %v252, 0.6931472
      %v254 = vmax.f32 %v247, -100.0
      %v255 = vmax.f32 %v249, -100.0
      %v256 = vmax.f32 %v251, -100.0
      %v257 = vmax.f32 %v253, -100.0
      %v258 = vsub.f32 0.0, %v254
      %v259 = vsub.f32 0.0, %v255
      %v260 = vsub.f32 0.0, %v256
      %v261 = vsub.f32 0.0, %v257
      %v262 = vsub.f32 1.0, %v238
      %v263 = vsub.f32 1.0, %v239
      %v264 = vsub.f32 1.0, %v240
      %v265 = vsub.f32 1.0, %v241
      %v266 = vmul.f32 %v262, %v262
      %v267 = vmul.f32 %v263, %v263
      %v268 = vmul.f32 %v264, %v264
      %v269 = vmul.f32 %v265, %v265
      %v270 = vmul.f32 %v242, %v266
      %v271 = vmul.f32 %v243, %v267
      %v272 = vmul.f32 %v244, %v268
      %v273 = vmul.f32 %v245, %v269
      %v274 = vmul.f32 %v270, %v258
      %v275 = vmul.f32 %v271, %v259
      %v276 = vmul.f32 %v272, %v260
      %v277 = vmul.f32 %v273, %v261
      %v278 = vadd.f32 %v274, %v275
      %v279 = vadd.f32 %v278, %v276
      %v280 = vadd.f32 %v279, %v277
      %v281 = vadd.f32 %v280, 0.0
      %v282 = vadd.f32 %v222, %v226
      %v283 = vadd.f32 %v223, %v227
      %v284 = vadd.f32 %v224, %v228
      %v285 = vadd.f32 %v225, %v229
      %v286 = vadd.f32 %v282, %v283
      %v287 = vadd.f32 %v286, %v284
      %v288 = vadd.f32 %v287, %v285
      %v289 = vadd.f32 %v288, 0.0
      %v290 = vmul.f32 %v222, %v226
      %v291 = vmul.f32 %v223, %v227
      %v292 = vmul.f32 %v224, %v228
      %v293 = vmul.f32 %v225, %v229
      %v294 = vadd.f32 %v290, %v291
      %v295 = vadd.f32 %v294, %v292
      %v296 = vadd.f32 %v295, %v293
      %v297 = vadd.f32 %v296, 0.0
      %v298 = vld [vmem:[#allocation7] sm:$0xff]
      %v299 = vadd.f32 %v298, %v281
      %300 = vst [vmem:[#allocation7] sm:$0xff] %v299
      %v301 = vld [vmem:[#allocation8] sm:$0xff]
      %v302 = vadd.f32 %v301, %v289
      %303 = vst [vmem:[#allocation8] sm:$0xff] %v302
      %v304 = vld [vmem:[#allocation10] sm:$0xff]
      %v305 = vadd.f32 %v304, %v297
      %306 = vst [vmem:[#allocation10] sm:$0xff] %v305
    $region29: #{tpu_custom_call.1} parent=1 // pred_fallthru
      _
    // Predicated region
    $region30: #{tpu_custom_call.1} parent=1 // pred_check
      _
    $region31: #{tpu_custom_call.1} parent=1 // pred_check_branch
      %308 = sbr.rel (0) target = $region33
    $region32: #{tpu_custom_call.1} parent=1 // pred_region
      %310 = vsyncadd [#allocation4], 0
      %s312 = sshll.u32 [#allocation7], 4
      %s313 = int_to_ptr.vmem [resolvable:$true] %s312
      %s314 = sshll.u32 %s2, 4
      %s315 = int_to_ptr.hbm [resolvable:$true] %s314
      %317 = dma.vmem_to_hbm [thread:$0]  %s313, 128, %s315, [#allocation4]
    $region33: #{tpu_custom_call.1} parent=1 // pred_fallthru
      _
    // Predicated region
    $region34: #{tpu_custom_call.1} parent=1 // pred_check
      _
    $region35: #{tpu_custom_call.1} parent=1 // pred_check_branch
      %319 = sbr.rel (0) target = $region37
    $region36: #{tpu_custom_call.1} parent=1 // pred_region
      %321 = vsyncadd [#allocation9], 0
      %s323 = sshll.u32 [#allocation8], 4
      %s324 = int_to_ptr.vmem [resolvable:$true] %s323
      %s325 = sshll.u32 %s3, 4
      %s326 = int_to_ptr.hbm [resolvable:$true] %s325
      %328 = dma.vmem_to_hbm [thread:$0]  %s324, 128, %s326, [#allocation9]
    $region37: #{tpu_custom_call.1} parent=1 // pred_fallthru
      _
    // Predicated region
    $region38: #{tpu_custom_call.1} parent=1 // pred_check
      _
    $region39: #{tpu_custom_call.1} parent=1 // pred_check_branch
      %330 = sbr.rel (0) target = $region41
    $region40: #{tpu_custom_call.1} parent=1 // pred_region
      %332 = vsyncadd [#allocation9], 0
      %s334 = sshll.u32 [#allocation10], 4
      %s335 = int_to_ptr.vmem [resolvable:$true] %s334
      %s336 = sshll.u32 %s4, 4
      %s337 = int_to_ptr.hbm [resolvable:$true] %s336
      %339 = dma.vmem_to_hbm [thread:$0]  %s335, 128, %s337, [#allocation9]
    $region41: #{tpu_custom_call.1} parent=1 // pred_fallthru
      _
    // Predicated region
    $region42: #{tpu_custom_call.1} parent=1 // pred_check
      _
    $region43: #{tpu_custom_call.1} parent=1 // pred_check_branch
      %341 = sbr.rel (0) target = $region45
    $region44: #{tpu_custom_call.1} parent=1 // pred_region
      %343 = dma.done [#allocation4], 128
    $region45: #{tpu_custom_call.1} parent=1 // pred_fallthru
      _
    // Predicated region
    $region46: #{tpu_custom_call.1} parent=1 // pred_check
      _
    $region47: #{tpu_custom_call.1} parent=1 // pred_check_branch
      %345 = sbr.rel (0) target = $region49
    $region48: #{tpu_custom_call.1} parent=1 // pred_region
      %347 = dma.done [#allocation9], 128
    $region49: #{tpu_custom_call.1} parent=1 // pred_fallthru
      _
    // Predicated region
    $region50: #{tpu_custom_call.1} parent=1 // pred_check
      _
    $region51: #{tpu_custom_call.1} parent=1 // pred_check_branch
      %349 = sbr.rel (0) target = $region53
    $region52: #{tpu_custom_call.1} parent=1 // pred_region
      %351 = dma.done [#allocation9], 128
    $region53: #{tpu_custom_call.1} parent=1 // pred_fallthru
      _
    %352 = vsyncpa [#allocation3], 1
    %353 = vsyncpa [#allocation6], 1
    %354 = vsyncpa [#allocation4], 1
    %355 = vsyncpa [#allocation9], 1

</llo_original>
